<compile_context>
chip_gen: v7x
topology: tpu7x:2x2x1
jax: 0.10.0
libtpu: 0.0.40
codegen_flags: <defaults>
</compile_context>

<pallas_src>
import jax
import jax.numpy as jnp
from jax.experimental import pallas as pl
from jax.experimental.pallas import tpu as pltpu


def _round_up(x, m):
    return (x + m - 1) // m * m


def _patch_embed_kernel(x_ref, w_ref, b_ref, o_ref):
    # (TM, K) @ (K, E) on the MXU, f32 accumulate, bias add in f32, cast on store.
    acc = jnp.dot(x_ref[...], w_ref[...], preferred_element_type=jnp.float32)
    o_ref[...] = (acc + b_ref[...]).astype(o_ref.dtype)


def _choose_tm(M, K, E, *, in_bytes=2, out_bytes=2,
               vmem_budget=14 * 1024 * 1024):
    """Largest row tile (multiple of 8, <= 1024) such that (possibly
    double-buffered) weight/bias plus double-buffered x/out tiles fit the
    scoped-VMEM budget (sized for v5e's 16 MiB default; v6e/v7x have more)."""
    resident = 2 * (K * E * in_bytes + E * 4)         # weight (bf16) + bias (f32), x2
    per_row = 2 * (K * in_bytes + E * out_bytes)      # x tile + out tile, double-buffered
    tm = (vmem_budget - resident) // max(per_row, 1)
    tm = int(max(128, min(1024, tm)))
    tm -= tm % 8
    # v7x megacore: keep at least two grid steps when there is work to split,
    # so the "parallel" M axis actually uses both TensorCores.
    if M > 256:
        tm = min(tm, _round_up(pl.cdiv(M, 2), 8))
    # Never larger than the (8-aligned) problem itself.
    tm = min(tm, _round_up(M, 8))
    return max(tm, 8)


def patch_embed_matmul(x_patches, w_proj, bias2d, *, out_dtype=jnp.bfloat16):
    """x_patches: (M, K) bf16, w_proj: (K, E) bf16, bias2d: (1, E) f32.

    Returns (M, E) in out_dtype.  Row axis is tiled/pipelined; weight and bias
    have constant block indices so they stay VMEM-resident across the grid.
    """
    M, K = x_patches.shape
    Kw, E = w_proj.shape
    assert K == Kw and bias2d.shape == (1, E)

    in_bytes = x_patches.dtype.itemsize
    out_bytes = jnp.dtype(out_dtype).itemsize
    TM = _choose_tm(M, K, E, in_bytes=in_bytes, out_bytes=out_bytes)
    grid_m = pl.cdiv(M, TM)

    flops = 2 * M * K * E
    bytes_accessed = (M * K * in_bytes
                      + K * E * w_proj.dtype.itemsize
                      + E * bias2d.dtype.itemsize
                      + M * E * out_bytes)

    return pl.pallas_call(
        _patch_embed_kernel,
        out_shape=jax.ShapeDtypeStruct((M, E), out_dtype),
        grid_spec=pltpu.PrefetchScalarGridSpec(
            num_scalar_prefetch=0,
            grid=(grid_m,),
            in_specs=[
                # Streamed row tiles (software-pipelined across the grid).
                pl.BlockSpec((TM, K), lambda i: (i, 0)),
                # Weight / bias: constant index_map -> VMEM resident.
                # (pipeline_mode=pl.Buffered(1) could reclaim their second
                # buffer; the TM budget above already assumes worst case.)
                pl.BlockSpec((K, E), lambda i: (0, 0)),
                pl.BlockSpec((1, E), lambda i: (0, 0)),
            ],
            out_specs=pl.BlockSpec((TM, E), lambda i: (i, 0)),
        ),
        compiler_params=pltpu.CompilerParams(
            dimension_semantics=("parallel",)),
        cost_estimate=pl.CostEstimate(
            flops=flops, bytes_accessed=bytes_accessed, transcendentals=0),
    )(x_patches, w_proj, bias2d)


class PatchEmbedPallas:
    """JAX/Pallas equivalent of prithvi.Prithvi.PatchEmbed (norm_layer=None, flatten=True)."""

    def __init__(self, img_size=16, patch_size=8, num_frames=2, tubelet_size=1,
                 in_chans=4, embed_dim=32, out_dtype=jnp.bfloat16,
                 key=jax.random.PRNGKey(0)):
        self.img_size = (img_size, img_size)
        self.patch_size = (patch_size, patch_size)
        self.num_frames = num_frames
        self.tubelet_size = tubelet_size
        self.in_chans = in_chans
        self.embed_dim = embed_dim
        self.out_dtype = out_dtype
        self.grid_size = (num_frames // tubelet_size,
                          img_size // patch_size,
                          img_size // patch_size)
        self.num_patches = self.grid_size[0] * self.grid_size[1] * self.grid_size[2]

        # Deterministic parameter init (matches Conv3d parameter shapes).
        k_w, k_b = jax.random.split(key)
        w_shape = (embed_dim, in_chans, tubelet_size, patch_size, patch_size)
        fan_in = in_chans * tubelet_size * patch_size * patch_size
        bound = 1.0 / (fan_in ** 0.5)
        self.weight = jax.random.uniform(k_w, w_shape, jnp.float32, -bound, bound)
        self.bias = jax.random.uniform(k_b, (embed_dim,), jnp.float32, -bound, bound)

        # Precompute matmul operands once (not per forward call):
        #   conv weight (E, C, kt, kh, kw) -> (K, E), bf16 for the MXU.
        #   bias stays f32 (bias add happens in f32 inside the kernel).
        K = fan_in
        self.w_proj_bf16 = self.weight.reshape(embed_dim, K).T.astype(jnp.bfloat16)
        self.bias2d = self.bias.reshape(1, embed_dim)

    def __call__(self, x):
        # x: (B, C, T, H, W)
        B, C, T, H, W = x.shape
        kt, kh, kw = self.tubelet_size, self.patch_size[0], self.patch_size[1]
        Tg, Hg, Wg = T // kt, H // kh, W // kw

        # --- glue: extract non-overlapping patches (pure layout, plain JAX) ---
        # Cast to bf16 *first* so the materialized XLA transpose moves 2 B/elem.
        # TODO(synk): fold this gather into the kernel (grid over (b, t', h'),
        # DMA (C, kt, kh, W) slabs from NCTHW and assemble the (Wg, K) tile in
        # VMEM) to remove this extra HBM round trip entirely.
        xp = x.astype(jnp.bfloat16).reshape(B, C, Tg, kt, Hg, kh, Wg, kw)
        xp = xp.transpose(0, 2, 4, 6, 1, 3, 5, 7)
        x_patches = xp.reshape(B * Tg * Hg * Wg, C * kt * kh * kw)

        # --- hot path: tiled matmul + bias in the Pallas kernel ---
        out = patch_embed_matmul(x_patches, self.w_proj_bf16, self.bias2d,
                                 out_dtype=self.out_dtype)

        # (B*N, E) -> (B, N, E)  == PyTorch's flatten(2).transpose(1, 2).
        # Contiguous reshape: no data movement.
        return out.reshape(B, Tg * Hg * Wg, self.embed_dim)


def _reference(x, weight, bias, tubelet, patch):
    """Plain-JAX f32 reference of the PyTorch forward (conv3d via lax)."""
    y = jax.lax.conv_general_dilated(
        x, weight,
        window_strides=(tubelet, patch, patch),
        padding="VALID",
        dimension_numbers=("NCDHW", "OIDHW", "NCDHW"))
    y = y + bias.reshape(1, -1, 1, 1, 1)
    B, E = y.shape[0], y.shape[1]
    y = y.reshape(B, E, -1)             # flatten(2)
    return jnp.transpose(y, (0, 2, 1))  # transpose(1, 2)


if __name__ == "__main__":
    # Small shapes consistent with the module:
    #   B=2, in_chans=4, num_frames=2, img_size=16, patch_size=8,
    #   tubelet_size=1, embed_dim=32  ->  num_patches = 2*2*2 = 8
    key = jax.random.PRNGKey(0)
    k_x, k_p = jax.random.split(key)

    module = PatchEmbedPallas(img_size=16, patch_size=8, num_frames=2,
                              tubelet_size=1, in_chans=4, embed_dim=32, key=k_p)

    x = jax.random.normal(k_x, (2, 4, 2, 16, 16), jnp.float32)

    fwd = jax.jit(module.__call__)
    out = jax.block_until_ready(fwd(x))

    ref = _reference(x, module.weight, module.bias,
                     module.tubelet_size, module.patch_size[0])
    assert out.shape == (2, module.num_patches, module.embed_dim), out.shape
    # bf16 matmul operands and bf16 output (f32 accumulate / bias inside the
    # kernel): loosened tolerance vs the f32 reference -- explicit precision
    # choice for embedding outputs.
    out_f32 = out.astype(jnp.float32)
    assert jnp.allclose(out_f32, ref, atol=5e-2, rtol=5e-2), \
        float(jnp.max(jnp.abs(out_f32 - ref)))

    print("KERNEL_OK")
</pallas_src>

<mosaic_0001>
module attributes {stable_mosaic.version = 11 : i64} {
  func.func @_patch_embed_kernel(%arg0: i32, %arg1: memref<16x256xbf16, #tpu.memory_space<vmem>>, %arg2: memref<256x32xbf16, #tpu.memory_space<vmem>>, %arg3: memref<1x32xf32, #tpu.memory_space<vmem>>, %arg4: memref<16x32xbf16, #tpu.memory_space<vmem>>) attributes {dimension_semantics = [#tpu.dimension_semantics<parallel>], iteration_bounds = array<i64: 1>, scalar_prefetch = 0 : i64, scratch_operands = 0 : i64, tpu.core_type = #tpu.core_type<tc>, window_params = [{transform_indices = @transform_0, window_bounds = array<i64: 16, 256>}, {pipeline_mode = #tpu.pipeline_mode<synchronous>, transform_indices = @transform_1, window_bounds = array<i64: 256, 32>}, {pipeline_mode = #tpu.pipeline_mode<synchronous>, transform_indices = @transform_2, window_bounds = array<i64: 1, 32>}, {transform_indices = @transform_3, window_bounds = array<i64: 16, 32>}]} {
    %c0 = arith.constant 0 : index
    %c0_0 = arith.constant 0 : index
    %0 = vector.load %arg1[%c0, %c0_0] : memref<16x256xbf16, #tpu.memory_space<vmem>>, vector<16x256xbf16>
    %c0_1 = arith.constant 0 : index
    %c0_2 = arith.constant 0 : index
    %1 = vector.load %arg2[%c0_1, %c0_2] : memref<256x32xbf16, #tpu.memory_space<vmem>>, vector<256x32xbf16>
    %cst = arith.constant dense<0.000000e+00> : vector<16x32xf32>
    %2 = tpu.matmul %0, %1, %cst {dimension_numbers = #tpu.dot_dimension_numbers<[1], [0], [0], [1], [0, 0, 1, 1], [], []>} : vector<16x256xbf16>, vector<256x32xbf16>, vector<16x32xf32> -> vector<16x32xf32>
    %c0_3 = arith.constant 0 : index
    %c0_4 = arith.constant 0 : index
    %3 = vector.load %arg3[%c0_3, %c0_4] : memref<1x32xf32, #tpu.memory_space<vmem>>, vector<1x32xf32>
    %4 = vector.broadcast %3 : vector<1x32xf32> to vector<16x32xf32>
    %5 = arith.addf %2, %4 : vector<16x32xf32>
    %6 = arith.truncf %5 : vector<16x32xf32> to vector<16x32xbf16>
    %c0_5 = arith.constant 0 : index
    %c0_6 = arith.constant 0 : index
    %7 = vector.load %arg4[%c0_5, %c0_6] : memref<16x32xbf16, #tpu.memory_space<vmem>>, vector<16x32xbf16>
    tpu.vector_store %arg4[%c0_5, %c0_6], %6 {strides = array<i32>} : memref<16x32xbf16, #tpu.memory_space<vmem>>, vector<16x32xbf16>,
    return
  }
  func.func @transform_0(%arg0: i32) -> (i32, i32) {
    %c0_i32 = arith.constant 0 : i32
    %c0_i32_0 = arith.constant 0 : i32
    return %arg0, %c0_i32 : i32, i32
  }
  func.func @transform_1(%arg0: i32) -> (i32, i32) {
    %c0_i32 = arith.constant 0 : i32
    %c0_i32_0 = arith.constant 0 : i32
    %c0_i32_1 = arith.constant 0 : i32
    return %c0_i32, %c0_i32_0 : i32, i32
  }
  func.func @transform_2(%arg0: i32) -> (i32, i32) {
    %c0_i32 = arith.constant 0 : i32
    %c0_i32_0 = arith.constant 0 : i32
    %c0_i32_1 = arith.constant 0 : i32
    return %c0_i32, %c0_i32_0 : i32, i32
  }
  func.func @transform_3(%arg0: i32) -> (i32, i32) {
    %c0_i32 = arith.constant 0 : i32
    %c0_i32_0 = arith.constant 0 : i32
    return %arg0, %c0_i32 : i32, i32
  }
}

</mosaic_0001>

<llo_original>
// kernel: a_call__.1
$region0: #{a_call__.1}
  #allocation0 [shape = 'u32[]', space=smem, size = 0x4, offset = 0x4, fixed_abs, tag = 'smem constant byte address 0x4 - core index']
  #allocation1 [shape = 'u32[144,128]{1,0:T(1,128)}', space=vmem, size = 0x12000, scoped, tag = 'internal scratch']
  %s0 = inlined_call_operand.vmem [shape: bf16[16,256], index: 0, kind: input, shape index: {}]
  %s1 = inlined_call_operand.vmem [shape: bf16[256,32], index: 1, kind: input, shape index: {}]
  %s2 = inlined_call_operand.vmem [shape: f32[1,32], index: 2, kind: input, shape index: {}]
  %s3 = inlined_call_operand.hbm [shape: bf16[16,32], index: 3, kind: output, shape index: {}]
  %s4 = sld [smem:[#allocation0]]
  $region22: #{a_call__.1} parent=0
    _
  %s6 = ssub.s32 1, %s4
  %s7 = scalar_select 0, %s6, %s4
  $region1: #{a_call__.1} parent=0
    #allocation2 [shape = 'u8[4096]{0}', space=vmem, size = 0x1000, scoped, tag = 'output window, operand 0, single buffered']
    #allocation3 [shape = 's32[1]{0}', space=sflag, size = 0x4, scoped, tag = 'scoped memory for a_call__.1']
    %8 = vsyncpa [#allocation3], 0
    // Predicated region
    $region2: #{a_call__.1} parent=1 // pred_check
      _
    $region3: #{a_call__.1} parent=1 // pred_check_branch
      %10 = sbr.rel (0) target = $region5
    $region4: #{a_call__.1} parent=1 // pred_region
      _
    $region5: #{a_call__.1} parent=1 // pred_fallthru
      _
    // Predicated region
    $region6: #{a_call__.1} parent=1 // pred_check
      _
    $region7: #{a_call__.1} parent=1 // pred_check_branch
      %12 = sbr.rel (0) target = $region9
    $region8: #{a_call__.1} parent=1 // pred_region
      _
    $region9: #{a_call__.1} parent=1 // pred_fallthru
      _
    // Predicated region
    $region10: #{a_call__.1} parent=1 // pred_check
      _
    $region11: #{a_call__.1} parent=1 // pred_check_branch
      %14 = sbr.rel (0) target = $region13
    $region12: #{a_call__.1} parent=1 // pred_region
      _
    $region13: #{a_call__.1} parent=1 // pred_fallthru
      _
    %v16 = vld [vmem:[%s0] sm:$0xff]
    %v17 = vld [vmem:[%s0 + $0x8] sm:$0xff]
    %v18 = vld [vmem:[%s1] sm:$0xf]
    %v19 = vld [vmem:[%s1 + $0x4] sm:$0xf]
    %v20 = vld [vmem:[%s1 + $0x8] sm:$0xf]
    %v21 = vld [vmem:[%s1 + $0xc] sm:$0xf]
    %v22 = vld [vmem:[%s1 + $0x10] sm:$0xf]
    %v23 = vld [vmem:[%s1 + $0x14] sm:$0xf]
    %v24 = vld [vmem:[%s1 + $0x18] sm:$0xf]
    %v25 = vld [vmem:[%s1 + $0x1c] sm:$0xf]
    %v26 = vld [vmem:[%s1 + $0x20] sm:$0xf]
    %v27 = vld [vmem:[%s1 + $0x24] sm:$0xf]
    %v28 = vld [vmem:[%s1 + $0x28] sm:$0xf]
    %v29 = vld [vmem:[%s1 + $0x2c] sm:$0xf]
    %v30 = vld [vmem:[%s1 + $0x30] sm:$0xf]
    %v31 = vld [vmem:[%s1 + $0x34] sm:$0xf]
    %v32 = vld [vmem:[%s1 + $0x38] sm:$0xf]
    %v33 = vld [vmem:[%s1 + $0x3c] sm:$0xf]
    %v34 = vld [vmem:[%s1 + $0x40] sm:$0xf]
    %v35 = vld [vmem:[%s1 + $0x44] sm:$0xf]
    %v36 = vld [vmem:[%s1 + $0x48] sm:$0xf]
    %v37 = vld [vmem:[%s1 + $0x4c] sm:$0xf]
    %v38 = vld [vmem:[%s1 + $0x50] sm:$0xf]
    %v39 = vld [vmem:[%s1 + $0x54] sm:$0xf]
    %v40 = vld [vmem:[%s1 + $0x58] sm:$0xf]
    %v41 = vld [vmem:[%s1 + $0x5c] sm:$0xf]
    %v42 = vld [vmem:[%s1 + $0x60] sm:$0xf]
    %v43 = vld [vmem:[%s1 + $0x64] sm:$0xf]
    %v44 = vld [vmem:[%s1 + $0x68] sm:$0xf]
    %v45 = vld [vmem:[%s1 + $0x6c] sm:$0xf]
    %v46 = vld [vmem:[%s1 + $0x70] sm:$0xf]
    %v47 = vld [vmem:[%s1 + $0x74] sm:$0xf]
    %v48 = vld [vmem:[%s1 + $0x78] sm:$0xf]
    %v49 = vld [vmem:[%s1 + $0x7c] sm:$0xf]
    %v50 = vld [vmem:[%s2] sm:$0x1]
    %v52 = vlaneseq
    %v53 = vshrl.u32 %v52, 7
    %v54 = vsub.s32 0, %v53
    %v55 = vrot.slane %v50, %v54
    %v59 = vunpack.c.l.b16 %v16
    %v60 = vunpack.c.h.b16 %v16
    %v61 = vunpack.c.l.b16 %v17
    %v62 = vunpack.c.h.b16 %v17
    %v63 = vpack.c.b16 %v61, %v59
    %v64 = vpack.c.b16 %v62, %v60
    %v99 = vunpack.c.l.b16 %v18
    %v100 = vunpack.c.l.b16 %v19
    %v101 = vunpack.c.l.b16 %v20
    %v102 = vunpack.c.l.b16 %v21
    %v103 = vunpack.c.l.b16 %v22
    %v104 = vunpack.c.l.b16 %v23
    %v105 = vunpack.c.l.b16 %v24
    %v106 = vunpack.c.l.b16 %v25
    %v107 = vunpack.c.l.b16 %v26
    %v108 = vunpack.c.l.b16 %v27
    %v109 = vunpack.c.l.b16 %v28
    %v110 = vunpack.c.l.b16 %v29
    %v111 = vunpack.c.l.b16 %v30
    %v112 = vunpack.c.l.b16 %v31
    %v113 = vunpack.c.l.b16 %v32
    %v114 = vunpack.c.l.b16 %v33
    %v115 = vunpack.c.l.b16 %v34
    %v116 = vunpack.c.l.b16 %v35
    %v117 = vunpack.c.l.b16 %v36
    %v118 = vunpack.c.l.b16 %v37
    %v119 = vunpack.c.l.b16 %v38
    %v120 = vunpack.c.l.b16 %v39
    %v121 = vunpack.c.l.b16 %v40
    %v122 = vunpack.c.l.b16 %v41
    %v123 = vunpack.c.l.b16 %v42
    %v124 = vunpack.c.l.b16 %v43
    %v125 = vunpack.c.l.b16 %v44
    %v126 = vunpack.c.l.b16 %v45
    %v127 = vunpack.c.l.b16 %v46
    %v128 = vunpack.c.l.b16 %v47
    %v129 = vunpack.c.l.b16 %v48
    %v130 = vunpack.c.l.b16 %v49
    %v131 = vpack.c.b16 %v100, %v99
    %v132 = vpack.c.b16 %v102, %v101
    %v133 = vpack.c.b16 %v104, %v103
    %v134 = vpack.c.b16 %v106, %v105
    %v135 = vpack.c.b16 %v108, %v107
    %v136 = vpack.c.b16 %v110, %v109
    %v137 = vpack.c.b16 %v112, %v111
    %v138 = vpack.c.b16 %v114, %v113
    %v139 = vpack.c.b16 %v116, %v115
    %v140 = vpack.c.b16 %v118, %v117
    %v141 = vpack.c.b16 %v120, %v119
    %v142 = vpack.c.b16 %v122, %v121
    %v143 = vpack.c.b16 %v124, %v123
    %v144 = vpack.c.b16 %v126, %v125
    %v145 = vpack.c.b16 %v128, %v127
    %v146 = vpack.c.b16 %v130, %v129
    %163 = vmatprep.subr.bf16.mxu0 0
    %164 = vmatpush1.bf16.msra.mxu0 %v131
    %165 = vmatprep.subr.bf16.mxu0 0
    %166 = vmatpush1.bf16.msra.mxu0 %v132
    %167 = vmatprep.subr.bf16.mxu0 0
    %168 = vmatpush1.bf16.msra.mxu0 %v133
    %169 = vmatprep.subr.bf16.mxu0 0
    %170 = vmatpush1.bf16.msra.mxu0 %v134
    %171 = vmatprep.subr.bf16.mxu0 0
    %172 = vmatpush1.bf16.msra.mxu0 %v135
    %173 = vmatprep.subr.bf16.mxu0 0
    %174 = vmatpush1.bf16.msra.mxu0 %v136
    %175 = vmatprep.subr.bf16.mxu0 0
    %176 = vmatpush1.bf16.msra.mxu0 %v137
    %177 = vmatprep.subr.bf16.mxu0 0
    %178 = vmatpush1.bf16.msra.mxu0 %v138
    %179 = vmatprep.subr.bf16.mxu0 0
    %180 = vmatpush1.bf16.msra.mxu0 %v139
    %181 = vmatprep.subr.bf16.mxu0 0
    %182 = vmatpush1.bf16.msra.mxu0 %v140
    %183 = vmatprep.subr.bf16.mxu0 0
    %184 = vmatpush1.bf16.msra.mxu0 %v141
    %185 = vmatprep.subr.bf16.mxu0 0
    %186 = vmatpush1.bf16.msra.mxu0 %v142
    %187 = vmatprep.subr.bf16.mxu0 0
    %188 = vmatpush1.bf16.msra.mxu0 %v143
    %189 = vmatprep.subr.bf16.mxu0 0
    %190 = vmatpush1.bf16.msra.mxu0 %v144
    %191 = vmatprep.subr.bf16.mxu0 0
    %192 = vmatpush1.bf16.msra.mxu0 %v145
    %193 = vmatprep.subr.bf16.mxu0 0
    %194 = vmatpush1.bf16.msra.mxu0 %v146
    %195 = vmatprep.mubr.bf16.mxu0 %v64
    %196 = vmatmul.mubr.bf16.gmra.mrb[0].mxu0 %v63
    %v197 = vpop.f32.mrb[0].mxu0
    %v198 = vadd.f32 %v55, %v197
    %v199 = vpop.f32.mrb[0].mxu0
    %v200 = vpop.f32.mrb[0].mxu0
    %v201 = vadd.f32 %v55, %v200
    %v202 = vpop.f32.mrb[0].mxu0
    %203 = vdwg.mxu0
    %v204 = vpack.c.bf16 %v201, %v198
    %v206 = vunpack.c.l.b16 %v204
    %v207 = vunpack.c.h.b16 %v204
    %v208 = vpack.c.b16 %v206, %v206
    %v209 = vpack.c.b16 %v207, %v207
    %vm212 = vcmask 257024
    %213 = vst.msk [vmem:[#allocation2] sm:$0xf] %vm212, %v208
    %214 = vst.msk [vmem:[#allocation2 + $0x4] sm:$0xf] %vm212, %v209
    // Predicated region
    $region14: #{a_call__.1} parent=1 // pred_check
      _
    $region15: #{a_call__.1} parent=1 // pred_check_branch
      %216 = sbr.rel (0) target = $region17
    $region16: #{a_call__.1} parent=1 // pred_region
      %s218 = ssub.s32 128, 128
      %219 = vsyncadd [#allocation3], %s218
      %s220 = sshll.u32 [#allocation2], 4
      %s221 = int_to_ptr.vmem [resolvable:$true] %s220
      %226 = dma.vmem_to_hbm [thread:$0]  %s221, 128, %s3, [#allocation3], 64, 64, 4
    $region17: #{a_call__.1} parent=1 // pred_fallthru
      _
    // Predicated region
    $region18: #{a_call__.1} parent=1 // pred_check
      _
    $region19: #{a_call__.1} parent=1 // pred_check_branch
      %228 = sbr.rel (0) target = $region21
    $region20: #{a_call__.1} parent=1 // pred_region
      %229 = dma.done [#allocation3], 128
    $region21: #{a_call__.1} parent=1 // pred_fallthru
      _
    %230 = vsyncpa [#allocation3], 1

</llo_original>
